<compile_context>
chip_gen: v6e
topology: v6e:2x2x1
jax: 0.10.0
libtpu: 0.0.40
codegen_flags: <defaults>
</compile_context>

<pallas_src>
import functools

import jax
import jax.numpy as jnp
from jax.experimental import pallas as pl
from jax.experimental.pallas import tpu as pltpu

_LANE = 128
_SUBLANE = 8
_NEG_INF = -1e30  # masks padded class columns out of the softmax


def _round_up(x, m):
    return (x + m - 1) // m * m


def _mlp_softmax_kernel(x_ref, w1_ref, b1_ref, w2_ref, b2_ref, w3_ref, b3_ref, o_ref):
    # x tile: (TB, n) bf16; weights bf16 (resident across grid); biases f32 (1, out).
    x = x_ref[...]  # bf16, feeds the MXU directly (no redundant f32 pass)

    # Linear 1 + ReLU: bf16 MXU inputs, f32 accumulation, f32 VPU epilogue.
    h1 = jnp.dot(x, w1_ref[...], preferred_element_type=jnp.float32) + b1_ref[...]
    h1 = jnp.maximum(h1, 0.0)

    # Linear 2 + ReLU.
    h2 = jnp.dot(h1.astype(jnp.bfloat16), w2_ref[...],
                 preferred_element_type=jnp.float32) + b2_ref[...]
    h2 = jnp.maximum(h2, 0.0)

    # Linear 3: class axis padded to a lane-dense multiple of 128; padded columns
    # carry a -1e30 bias so they vanish after exp (denominator stays correct).
    logits = jnp.dot(h2.astype(jnp.bfloat16), w3_ref[...],
                     preferred_element_type=jnp.float32) + b3_ref[...]

    # Dropout(p=0.3) in eval mode is identity.
    # TODO(synk): training-mode dropout (random mask + 1/(1-p) scale) via pltpu.prng_random_bits.

    # Numerically stable softmax over the (padded) class axis.
    m = jnp.max(logits, axis=1, keepdims=True)
    e = jnp.exp(logits - m)
    denom = jnp.sum(e, axis=1, keepdims=True)
    # Reciprocal on the EUP slot instead of a VALU divide.
    o_ref[...] = (e * pl.reciprocal(denom, approx=True)).astype(o_ref.dtype)


@functools.partial(jax.jit, static_argnames=("batch_tile",))
def our_module_forward(x, w1, b1, w2, b2, w3, b3, *, batch_tile=256):
    """Forward pass of OurModule (eval mode): 3x Linear/ReLU -> Softmax."""
    batch, num_inputs = x.shape
    num_classes = w3.shape[1]

    # ---- pad the class axis to a lane-dense multiple of 128 ----
    nc_pad = _round_up(num_classes, _LANE)
    w3p = jnp.pad(w3, ((0, 0), (0, nc_pad - num_classes)))
    b3p = jnp.pad(b3, ((0, 0), (0, nc_pad - num_classes)), constant_values=_NEG_INF)

    # ---- pick a batch tile and pad batch to a multiple of it ----
    tb = min(batch_tile, _round_up(batch, _SUBLANE))
    batch_pad = _round_up(batch, tb)
    if batch_pad != batch:
        x = jnp.pad(x, ((0, batch_pad - batch), (0, 0)))

    # ---- bf16 on the HBM/MXU path; biases stay f32 ----
    xb = x.astype(jnp.bfloat16)
    w1b = w1.astype(jnp.bfloat16)
    w2b = w2.astype(jnp.bfloat16)
    w3b = w3p.astype(jnp.bfloat16)
    b1f = b1.astype(jnp.float32)
    b2f = b2.astype(jnp.float32)
    b3f = b3p.astype(jnp.float32)

    grid = (batch_pad // tb,)

    # ---- VMEM budget: double-buffered blocks + f32 intermediates, clamped for v7x ----
    def nbytes(n_elems, itemsize):
        return n_elems * itemsize

    resident = 2 * (
        nbytes(tb * num_inputs, 2)                          # x tile (bf16)
        + nbytes(w1b.size, 2) + nbytes(w2b.size, 2) + nbytes(w3b.size, 2)
        + nbytes(b1f.size, 4) + nbytes(b2f.size, 4) + nbytes(b3f.size, 4)
        + nbytes(tb * nc_pad, 4)                            # out tile (f32)
    )
    intermediates = tb * (2 * num_inputs + 4 * num_inputs + nc_pad) * 4 * 2
    vmem_limit = int(min(max(resident + intermediates + (4 << 20), 32 << 20), 56 << 20))

    x_spec = pl.BlockSpec((tb, num_inputs), lambda i: (i, 0))
    out_spec = pl.BlockSpec((tb, nc_pad), lambda i: (i, 0))
    resident_spec = lambda a: pl.BlockSpec(a.shape, lambda i: (0, 0))  # loop-invariant

    out_pad = pl.pallas_call(
        _mlp_softmax_kernel,
        grid=grid,
        out_shape=jax.ShapeDtypeStruct((batch_pad, nc_pad), jnp.float32),
        in_specs=[
            x_spec,
            resident_spec(w1b), resident_spec(b1f),
            resident_spec(w2b), resident_spec(b2f),
            resident_spec(w3b), resident_spec(b3f),
        ],
        out_specs=out_spec,
        compiler_params=pltpu.CompilerParams(
            dimension_semantics=("parallel",),
            vmem_limit_bytes=vmem_limit,
        ),
    )(xb, w1b, b1f, w2b, b2f, w3b, b3f)

    return out_pad[:batch, :num_classes]


def init_params(key, num_inputs, num_classes):
    """Uniform(-1/sqrt(fan_in), 1/sqrt(fan_in)) init, same scheme as nn.Linear default.
    Weights stored as (in_features, out_features); biases as (1, out_features)."""
    dims = [num_inputs, num_inputs * 2, num_inputs * 4, num_classes]
    params = []
    keys = jax.random.split(key, 2 * (len(dims) - 1))
    for i in range(len(dims) - 1):
        fan_in, fan_out = dims[i], dims[i + 1]
        bound = 1.0 / (fan_in ** 0.5)
        w = jax.random.uniform(keys[2 * i], (fan_in, fan_out),
                               minval=-bound, maxval=bound, dtype=jnp.float32)
        b = jax.random.uniform(keys[2 * i + 1], (1, fan_out),
                               minval=-bound, maxval=bound, dtype=jnp.float32)
        params += [w, b]
    return params


if __name__ == "__main__":
    num_inputs = 32
    num_classes = 8
    batch = 2

    key = jax.random.PRNGKey(0)
    kx, kp = jax.random.split(key)

    x = jax.random.normal(kx, (batch, num_inputs), dtype=jnp.float32)
    w1, b1, w2, b2, w3, b3 = init_params(kp, num_inputs, num_classes)

    out = our_module_forward(x, w1, b1, w2, b2, w3, b3)
    out = jax.block_until_ready(out)

    # sanity: shape, non-negative probabilities, rows sum to ~1
    assert out.shape == (batch, num_classes)
    assert bool(jnp.all(out >= 0.0))
    assert jnp.allclose(jnp.sum(out, axis=1), 1.0, atol=1e-2)

    print("KERNEL_OK")
</pallas_src>

<mosaic_0001>
module attributes {stable_mosaic.version = 11 : i64} {
  func.func @_mlp_softmax_kernel(%arg0: i32, %arg1: memref<8x32xbf16, #tpu.memory_space<vmem>>, %arg2: memref<32x64xbf16, #tpu.memory_space<vmem>>, %arg3: memref<1x64xf32, #tpu.memory_space<vmem>>, %arg4: memref<64x128xbf16, #tpu.memory_space<vmem>>, %arg5: memref<1x128xf32, #tpu.memory_space<vmem>>, %arg6: memref<128x128xbf16, #tpu.memory_space<vmem>>, %arg7: memref<1x128xf32, #tpu.memory_space<vmem>>, %arg8: memref<8x128xf32, #tpu.memory_space<vmem>>) attributes {dimension_semantics = [#tpu.dimension_semantics<parallel>], iteration_bounds = array<i64: 1>, scalar_prefetch = 0 : i64, scratch_operands = 0 : i64, tpu.core_type = #tpu.core_type<tc>, window_params = [{transform_indices = @transform_0, window_bounds = array<i64: 8, 32>}, {pipeline_mode = #tpu.pipeline_mode<synchronous>, transform_indices = @transform_1, window_bounds = array<i64: 32, 64>}, {pipeline_mode = #tpu.pipeline_mode<synchronous>, transform_indices = @transform_2, window_bounds = array<i64: 1, 64>}, {pipeline_mode = #tpu.pipeline_mode<synchronous>, transform_indices = @transform_3, window_bounds = array<i64: 64, 128>}, {pipeline_mode = #tpu.pipeline_mode<synchronous>, transform_indices = @transform_4, window_bounds = array<i64: 1, 128>}, {pipeline_mode = #tpu.pipeline_mode<synchronous>, transform_indices = @transform_5, window_bounds = array<i64: 128, 128>}, {pipeline_mode = #tpu.pipeline_mode<synchronous>, transform_indices = @transform_6, window_bounds = array<i64: 1, 128>}, {transform_indices = @transform_7, window_bounds = array<i64: 8, 128>}]} {
    %c0 = arith.constant 0 : index
    %c0_0 = arith.constant 0 : index
    %0 = vector.load %arg1[%c0, %c0_0] : memref<8x32xbf16, #tpu.memory_space<vmem>>, vector<8x32xbf16>
    %c0_1 = arith.constant 0 : index
    %c0_2 = arith.constant 0 : index
    %1 = vector.load %arg2[%c0_1, %c0_2] : memref<32x64xbf16, #tpu.memory_space<vmem>>, vector<32x64xbf16>
    %cst = arith.constant dense<0.000000e+00> : vector<8x64xf32>
    %2 = tpu.matmul %0, %1, %cst {dimension_numbers = #tpu.dot_dimension_numbers<[1], [0], [0], [1], [0, 0, 1, 1], [], []>} : vector<8x32xbf16>, vector<32x64xbf16>, vector<8x64xf32> -> vector<8x64xf32>
    %c0_3 = arith.constant 0 : index
    %c0_4 = arith.constant 0 : index
    %3 = vector.load %arg3[%c0_3, %c0_4] : memref<1x64xf32, #tpu.memory_space<vmem>>, vector<1x64xf32>
    %4 = vector.broadcast %3 : vector<1x64xf32> to vector<8x64xf32>
    %5 = arith.addf %2, %4 : vector<8x64xf32>
    %cst_5 = arith.constant 0.000000e+00 : f32
    %6 = vector.broadcast %cst_5 : f32 to vector<8x64xf32>
    %7 = arith.maximumf %5, %6 : vector<8x64xf32>
    %8 = arith.truncf %7 : vector<8x64xf32> to vector<8x64xbf16>
    %c0_6 = arith.constant 0 : index
    %c0_7 = arith.constant 0 : index
    %9 = vector.load %arg4[%c0_6, %c0_7] : memref<64x128xbf16, #tpu.memory_space<vmem>>, vector<64x128xbf16>
    %cst_8 = arith.constant dense<0.000000e+00> : vector<8x128xf32>
    %10 = tpu.matmul %8, %9, %cst_8 {dimension_numbers = #tpu.dot_dimension_numbers<[1], [0], [0], [1], [0, 0, 1, 1], [], []>} : vector<8x64xbf16>, vector<64x128xbf16>, vector<8x128xf32> -> vector<8x128xf32>
    %c0_9 = arith.constant 0 : index
    %c0_10 = arith.constant 0 : index
    %11 = vector.load %arg5[%c0_9, %c0_10] : memref<1x128xf32, #tpu.memory_space<vmem>>, vector<1x128xf32>
    %12 = vector.broadcast %11 : vector<1x128xf32> to vector<8x128xf32>
    %13 = arith.addf %10, %12 : vector<8x128xf32>
    %cst_11 = arith.constant 0.000000e+00 : f32
    %14 = vector.broadcast %cst_11 : f32 to vector<8x128xf32>
    %15 = arith.maximumf %13, %14 : vector<8x128xf32>
    %16 = arith.truncf %15 : vector<8x128xf32> to vector<8x128xbf16>
    %c0_12 = arith.constant 0 : index
    %c0_13 = arith.constant 0 : index
    %17 = vector.load %arg6[%c0_12, %c0_13] : memref<128x128xbf16, #tpu.memory_space<vmem>>, vector<128x128xbf16>
    %cst_14 = arith.constant dense<0.000000e+00> : vector<8x128xf32>
    %18 = tpu.matmul %16, %17, %cst_14 {dimension_numbers = #tpu.dot_dimension_numbers<[1], [0], [0], [1], [0, 0, 1, 1], [], []>} : vector<8x128xbf16>, vector<128x128xbf16>, vector<8x128xf32> -> vector<8x128xf32>
    %c0_15 = arith.constant 0 : index
    %c0_16 = arith.constant 0 : index
    %19 = vector.load %arg7[%c0_15, %c0_16] : memref<1x128xf32, #tpu.memory_space<vmem>>, vector<1x128xf32>
    %20 = vector.broadcast %19 : vector<1x128xf32> to vector<8x128xf32>
    %21 = arith.addf %18, %20 : vector<8x128xf32>
    %cst_17 = arith.constant dense<0xFF800000> : vector<8xf32>
    %22 = vector.multi_reduction <maximumf>, %21, %cst_17 [1] : vector<8x128xf32> to vector<8xf32>
    %23 = vector.shape_cast %22 : vector<8xf32> to vector<8x1xf32>
    %24 = vector.broadcast %23 : vector<8x1xf32> to vector<8x128xf32>
    %25 = arith.subf %21, %24 : vector<8x128xf32>
    %26 = math.exp %25 : vector<8x128xf32>
    %cst_18 = arith.constant dense<0.000000e+00> : vector<8xf32>
    %27 = vector.multi_reduction <add>, %26, %cst_18 [1] : vector<8x128xf32> to vector<8xf32>
    %28 = vector.shape_cast %27 : vector<8xf32> to vector<8x1xf32>
    %29 = tpu.reciprocal %28 {approx = true} : vector<8x1xf32> -> vector<8x1xf32>
    %30 = vector.broadcast %29 : vector<8x1xf32> to vector<8x128xf32>
    %31 = arith.mulf %26, %30 : vector<8x128xf32>
    %c0_19 = arith.constant 0 : index
    %c0_20 = arith.constant 0 : index
    %32 = vector.load %arg8[%c0_19, %c0_20] : memref<8x128xf32, #tpu.memory_space<vmem>>, vector<8x128xf32>
    tpu.vector_store %arg8[%c0_19, %c0_20], %31 {strides = array<i32>} : memref<8x128xf32, #tpu.memory_space<vmem>>, vector<8x128xf32>,
    return
  }
  func.func @transform_0(%arg0: i32) -> (i32, i32) {
    %c0_i32 = arith.constant 0 : i32
    %c0_i32_0 = arith.constant 0 : i32
    return %arg0, %c0_i32 : i32, i32
  }
  func.func @transform_1(%arg0: i32) -> (i32, i32) {
    %c0_i32 = arith.constant 0 : i32
    %c0_i32_0 = arith.constant 0 : i32
    %c0_i32_1 = arith.constant 0 : i32
    return %c0_i32, %c0_i32_0 : i32, i32
  }
  func.func @transform_2(%arg0: i32) -> (i32, i32) {
    %c0_i32 = arith.constant 0 : i32
    %c0_i32_0 = arith.constant 0 : i32
    %c0_i32_1 = arith.constant 0 : i32
    return %c0_i32, %c0_i32_0 : i32, i32
  }
  func.func @transform_3(%arg0: i32) -> (i32, i32) {
    %c0_i32 = arith.constant 0 : i32
    %c0_i32_0 = arith.constant 0 : i32
    %c0_i32_1 = arith.constant 0 : i32
    return %c0_i32, %c0_i32_0 : i32, i32
  }
  func.func @transform_4(%arg0: i32) -> (i32, i32) {
    %c0_i32 = arith.constant 0 : i32
    %c0_i32_0 = arith.constant 0 : i32
    %c0_i32_1 = arith.constant 0 : i32
    return %c0_i32, %c0_i32_0 : i32, i32
  }
  func.func @transform_5(%arg0: i32) -> (i32, i32) {
    %c0_i32 = arith.constant 0 : i32
    %c0_i32_0 = arith.constant 0 : i32
    %c0_i32_1 = arith.constant 0 : i32
    return %c0_i32, %c0_i32_0 : i32, i32
  }
  func.func @transform_6(%arg0: i32) -> (i32, i32) {
    %c0_i32 = arith.constant 0 : i32
    %c0_i32_0 = arith.constant 0 : i32
    %c0_i32_1 = arith.constant 0 : i32
    return %c0_i32, %c0_i32_0 : i32, i32
  }
  func.func @transform_7(%arg0: i32) -> (i32, i32) {
    %c0_i32 = arith.constant 0 : i32
    %c0_i32_0 = arith.constant 0 : i32
    return %arg0, %c0_i32 : i32, i32
  }
}

</mosaic_0001>

<llo_original>
// kernel: our_module_forward.1
$region0: #{our_module_forward.1}
  #allocation0 [shape = 'u32[]', space=smem, size = 0x4, offset = 0x4, fixed_abs, tag = 'smem constant byte address 0x4 - core index']
  #allocation1 [shape = 'u32[144,128]{1,0:T(1,128)}', space=vmem, size = 0x12000, scoped, tag = 'internal scratch']
  %s0 = inlined_call_operand.vmem [shape: bf16[8,32], index: 0, kind: input, shape index: {}]
  %s1 = inlined_call_operand.vmem [shape: bf16[32,64], index: 1, kind: input, shape index: {}]
  %s2 = inlined_call_operand.vmem [shape: f32[1,64], index: 2, kind: input, shape index: {}]
  %s3 = inlined_call_operand.vmem [shape: bf16[64,128], index: 3, kind: input, shape index: {}]
  %s4 = inlined_call_operand.vmem [shape: f32[1,128], index: 4, kind: input, shape index: {}]
  %s5 = inlined_call_operand.vmem [shape: bf16[128,128], index: 5, kind: input, shape index: {}]
  %s6 = inlined_call_operand.vmem [shape: f32[1,128], index: 6, kind: input, shape index: {}]
  %s7 = inlined_call_operand.vmem [shape: f32[8,128], index: 7, kind: output, shape index: {}]
  %s8 = sld [smem:[#allocation0]]
  $region38: #{our_module_forward.1} parent=0
    _
  %s10 = ssub.s32 1, %s8
  %s11 = scalar_select 0, %s10, %s8
  // Predicated region
  $region2: #{our_module_forward.1} parent=0 // pred_check
    _
  $region3: #{our_module_forward.1} parent=0 // pred_check_branch
    %13 = sbr.rel (0) target = $region5
  $region4: #{our_module_forward.1} parent=0 // pred_region
    _
  $region5: #{our_module_forward.1} parent=0 // pred_fallthru
    _
  // Predicated region
  $region6: #{our_module_forward.1} parent=0 // pred_check
    _
  $region7: #{our_module_forward.1} parent=0 // pred_check_branch
    %15 = sbr.rel (0) target = $region9
  $region8: #{our_module_forward.1} parent=0 // pred_region
    _
  $region9: #{our_module_forward.1} parent=0 // pred_fallthru
    _
  // Predicated region
  $region10: #{our_module_forward.1} parent=0 // pred_check
    _
  $region11: #{our_module_forward.1} parent=0 // pred_check_branch
    %17 = sbr.rel (0) target = $region13
  $region12: #{our_module_forward.1} parent=0 // pred_region
    _
  $region13: #{our_module_forward.1} parent=0 // pred_fallthru
    _
  // Predicated region
  $region14: #{our_module_forward.1} parent=0 // pred_check
    _
  $region15: #{our_module_forward.1} parent=0 // pred_check_branch
    %19 = sbr.rel (0) target = $region17
  $region16: #{our_module_forward.1} parent=0 // pred_region
    _
  $region17: #{our_module_forward.1} parent=0 // pred_fallthru
    _
  // Predicated region
  $region18: #{our_module_forward.1} parent=0 // pred_check
    _
  $region19: #{our_module_forward.1} parent=0 // pred_check_branch
    %21 = sbr.rel (0) target = $region21
  $region20: #{our_module_forward.1} parent=0 // pred_region
    _
  $region21: #{our_module_forward.1} parent=0 // pred_fallthru
    _
  // Predicated region
  $region22: #{our_module_forward.1} parent=0 // pred_check
    _
  $region23: #{our_module_forward.1} parent=0 // pred_check_branch
    %23 = sbr.rel (0) target = $region25
  $region24: #{our_module_forward.1} parent=0 // pred_region
    _
  $region25: #{our_module_forward.1} parent=0 // pred_fallthru
    _
  // Predicated region
  $region26: #{our_module_forward.1} parent=0 // pred_check
    _
  $region27: #{our_module_forward.1} parent=0 // pred_check_branch
    %25 = sbr.rel (0) target = $region29
  $region28: #{our_module_forward.1} parent=0 // pred_region
    _
  $region29: #{our_module_forward.1} parent=0 // pred_fallthru
    _
  %v27 = vld [vmem:[%s0] sm:$0xf]
  %v28 = vld [vmem:[%s1] sm:$0xf]
  %v29 = vld [vmem:[%s1 + $0x4] sm:$0xf]
  %v30 = vld [vmem:[%s1 + $0x8] sm:$0xf]
  %v31 = vld [vmem:[%s1 + $0xc] sm:$0xf]
  %v32 = vld [vmem:[%s2] sm:$0x1]
  %v34 = vlaneseq
  %v35 = vshrl.u32 %v34, 7
  %v36 = vsub.s32 0, %v35
  %v37 = vrot.slane %v32, %v36
  %v43 = vunpack.c.l.b16 %v28
  %v44 = vunpack.c.l.b16 %v29
  %v45 = vunpack.c.l.b16 %v30
  %v46 = vunpack.c.l.b16 %v31
  %v47 = vpack.c.b16 %v44, %v43
  %v48 = vpack.c.b16 %v46, %v45
  %vm51 = vcmask 261120
  %v53 = vsel %vm51, %v27, 0
  %55 = vmatprep.subr.bf16.mxu0 0
  %56 = vmatpush1.bf16.msra.mxu0 0
  %57 = vmatprep.subr.bf16.mxu0 0
  %58 = vmatpush1.bf16.msra.mxu0 0
  %59 = vmatprep.subr.bf16.mxu0 0
  %60 = vmatpush1.bf16.msra.mxu0 0
  %61 = vmatprep.subr.bf16.mxu0 0
  %62 = vmatpush1.bf16.msra.mxu0 0
  %63 = vmatprep.subr.bf16.mxu0 0
  %64 = vmatpush1.bf16.msra.mxu0 0
  %65 = vmatprep.subr.bf16.mxu0 0
  %66 = vmatpush1.bf16.msra.mxu0 0
  %67 = vmatprep.subr.bf16.mxu0 0
  %68 = vmatpush1.bf16.msra.mxu0 %v48
  %69 = vmatprep.subr.bf16.mxu0 0
  %70 = vmatpush1.bf16.msra.mxu0 %v47
  %71 = vmatprep.subr.bf16.mxu0 0
  %72 = vmatpush2.bf16.msra.mxu0 0
  %73 = vmatprep.subr.bf16.mxu0 0
  %74 = vmatpush2.bf16.msra.mxu0 0
  %75 = vmatprep.subr.bf16.mxu0 0
  %76 = vmatpush2.bf16.msra.mxu0 0
  %77 = vmatprep.subr.bf16.mxu0 0
  %78 = vmatpush2.bf16.msra.mxu0 0
  %79 = vmatprep.subr.bf16.mxu0 0
  %80 = vmatpush2.bf16.msra.mxu0 0
  %81 = vmatprep.subr.bf16.mxu0 0
  %82 = vmatpush2.bf16.msra.mxu0 0
  %83 = vmatprep.subr.bf16.mxu0 0
  %84 = vmatpush2.bf16.msra.mxu0 0
  %85 = vmatprep.subr.bf16.mxu0 0
  %86 = vmatpush2.bf16.msra.mxu0 0
  %87 = vmatprep.mubr.bf16.mxu0 0
  %88 = vmatmul.mubr.bf16.gmra.mxu0 %v53
  %v89 = vpop.f32.mrf.mxu0
  %v90 = vadd.f32 %v37, %v89
  %v91 = vpop.f32.mrf.mxu0
  %v92 = vpop.f32.mrf.mxu0
  %v93 = vpop.f32.mrf.mxu0
  %94 = vdwg.mxu0
  %v95 = vmax.f32 %v90, 0.0
  %v96 = vpack.c.bf16 %v95, %v95
  %v97 = vld [vmem:[%s3] sm:$0xf]
  %v98 = vld [vmem:[%s3 + $0x4] sm:$0xf]
  %v99 = vld [vmem:[%s3 + $0x8] sm:$0xf]
  %v100 = vld [vmem:[%s3 + $0xc] sm:$0xf]
  %v101 = vld [vmem:[%s3 + $0x10] sm:$0xf]
  %v102 = vld [vmem:[%s3 + $0x14] sm:$0xf]
  %v103 = vld [vmem:[%s3 + $0x18] sm:$0xf]
  %v104 = vld [vmem:[%s3 + $0x1c] sm:$0xf]
  %v105 = vld [vmem:[%s4] sm:$0x1]
  %v107 = vlaneseq
  %v108 = vshrl.u32 %v107, 7
  %v109 = vsub.s32 0, %v108
  %v110 = vrot.slane %v105, %v109
  %v120 = vunpack.c.l.b16 %v97
  %v121 = vunpack.c.l.b16 %v98
  %v122 = vunpack.c.l.b16 %v99
  %v123 = vunpack.c.l.b16 %v100
  %v124 = vunpack.c.l.b16 %v101
  %v125 = vunpack.c.l.b16 %v102
  %v126 = vunpack.c.l.b16 %v103
  %v127 = vunpack.c.l.b16 %v104
  %v128 = vpack.c.b16 %v121, %v120
  %v129 = vpack.c.b16 %v123, %v122
  %v130 = vpack.c.b16 %v125, %v124
  %v131 = vpack.c.b16 %v127, %v126
  %vm136 = vcmask 523264
  %v138 = vsel %vm136, %v96, 0
  %140 = vmatprep.subr.bf16.mxu0 0
  %141 = vmatpush1.bf16.msra.mxu0 0
  %142 = vmatprep.subr.bf16.mxu0 0
  %143 = vmatpush1.bf16.msra.mxu0 0
  %144 = vmatprep.subr.bf16.mxu0 0
  %145 = vmatpush1.bf16.msra.mxu0 0
  %146 = vmatprep.subr.bf16.mxu0 0
  %147 = vmatpush1.bf16.msra.mxu0 0
  %148 = vmatprep.subr.bf16.mxu0 0
  %149 = vmatpush1.bf16.msra.mxu0 %v131
  %150 = vmatprep.subr.bf16.mxu0 0
  %151 = vmatpush1.bf16.msra.mxu0 %v130
  %152 = vmatprep.subr.bf16.mxu0 0
  %153 = vmatpush1.bf16.msra.mxu0 %v129
  %154 = vmatprep.subr.bf16.mxu0 0
  %155 = vmatpush1.bf16.msra.mxu0 %v128
  %156 = vmatprep.subr.bf16.mxu0 0
  %157 = vmatpush2.bf16.msra.mxu0 0
  %158 = vmatprep.subr.bf16.mxu0 0
  %159 = vmatpush2.bf16.msra.mxu0 0
  %160 = vmatprep.subr.bf16.mxu0 0
  %161 = vmatpush2.bf16.msra.mxu0 0
  %162 = vmatprep.subr.bf16.mxu0 0
  %163 = vmatpush2.bf16.msra.mxu0 0
  %164 = vmatprep.subr.bf16.mxu0 0
  %165 = vmatpush2.bf16.msra.mxu0 0
  %166 = vmatprep.subr.bf16.mxu0 0
  %167 = vmatpush2.bf16.msra.mxu0 0
  %168 = vmatprep.subr.bf16.mxu0 0
  %169 = vmatpush2.bf16.msra.mxu0 0
  %170 = vmatprep.subr.bf16.mxu0 0
  %171 = vmatpush2.bf16.msra.mxu0 0
  %172 = vmatprep.mubr.bf16.mxu0 0
  %173 = vmatmul.mubr.bf16.gmra.mxu0 %v138
  %v174 = vpop.f32.mrf.mxu0
  %v175 = vadd.f32 %v110, %v174
  %v176 = vpop.f32.mrf.mxu0
  %v177 = vpop.f32.mrf.mxu0
  %v178 = vpop.f32.mrf.mxu0
  %179 = vdwg.mxu0
  %v180 = vmax.f32 %v175, 0.0
  %v181 = vpack.c.bf16 %v180, %v180
  %v182 = vld [vmem:[%s5] sm:$0xf]
  %v183 = vld [vmem:[%s5 + $0x4] sm:$0xf]
  %v184 = vld [vmem:[%s5 + $0x8] sm:$0xf]
  %v185 = vld [vmem:[%s5 + $0xc] sm:$0xf]
  %v186 = vld [vmem:[%s5 + $0x10] sm:$0xf]
  %v187 = vld [vmem:[%s5 + $0x14] sm:$0xf]
  %v188 = vld [vmem:[%s5 + $0x18] sm:$0xf]
  %v189 = vld [vmem:[%s5 + $0x1c] sm:$0xf]
  %v190 = vld [vmem:[%s5 + $0x20] sm:$0xf]
  %v191 = vld [vmem:[%s5 + $0x24] sm:$0xf]
  %v192 = vld [vmem:[%s5 + $0x28] sm:$0xf]
  %v193 = vld [vmem:[%s5 + $0x2c] sm:$0xf]
  %v194 = vld [vmem:[%s5 + $0x30] sm:$0xf]
  %v195 = vld [vmem:[%s5 + $0x34] sm:$0xf]
  %v196 = vld [vmem:[%s5 + $0x38] sm:$0xf]
  %v197 = vld [vmem:[%s5 + $0x3c] sm:$0xf]
  %v198 = vld [vmem:[%s6] sm:$0x1]
  %v200 = vlaneseq
  %v201 = vshrl.u32 %v200, 7
  %v202 = vsub.s32 0, %v201
  %v203 = vrot.slane %v198, %v202
  %v221 = vunpack.c.l.b16 %v182
  %v222 = vunpack.c.l.b16 %v183
  %v223 = vunpack.c.l.b16 %v184
  %v224 = vunpack.c.l.b16 %v185
  %v225 = vunpack.c.l.b16 %v186
  %v226 = vunpack.c.l.b16 %v187
  %v227 = vunpack.c.l.b16 %v188
  %v228 = vunpack.c.l.b16 %v189
  %v229 = vunpack.c.l.b16 %v190
  %v230 = vunpack.c.l.b16 %v191
  %v231 = vunpack.c.l.b16 %v192
  %v232 = vunpack.c.l.b16 %v193
  %v233 = vunpack.c.l.b16 %v194
  %v234 = vunpack.c.l.b16 %v195
  %v235 = vunpack.c.l.b16 %v196
  %v236 = vunpack.c.l.b16 %v197
  %v237 = vpack.c.b16 %v222, %v221
  %v238 = vpack.c.b16 %v224, %v223
  %v239 = vpack.c.b16 %v226, %v225
  %v240 = vpack.c.b16 %v228, %v227
  %v241 = vpack.c.b16 %v230, %v229
  %v242 = vpack.c.b16 %v232, %v231
  %v243 = vpack.c.b16 %v234, %v233
  %v244 = vpack.c.b16 %v236, %v235
  %253 = vmatprep.subr.bf16.mxu0 0
  %254 = vmatpush1.bf16.msra.mxu0 %v244
  %255 = vmatprep.subr.bf16.mxu0 0
  %256 = vmatpush1.bf16.msra.mxu0 %v243
  %257 = vmatprep.subr.bf16.mxu0 0
  %258 = vmatpush1.bf16.msra.mxu0 %v242
  %259 = vmatprep.subr.bf16.mxu0 0
  %260 = vmatpush1.bf16.msra.mxu0 %v241
  %261 = vmatprep.subr.bf16.mxu0 0
  %262 = vmatpush1.bf16.msra.mxu0 %v240
  %263 = vmatprep.subr.bf16.mxu0 0
  %264 = vmatpush1.bf16.msra.mxu0 %v239
  %265 = vmatprep.subr.bf16.mxu0 0
  %266 = vmatpush1.bf16.msra.mxu0 %v238
  %267 = vmatprep.subr.bf16.mxu0 0
  %268 = vmatpush1.bf16.msra.mxu0 %v237
  %269 = vmatprep.subr.bf16.mxu0 0
  %270 = vmatpush2.bf16.msra.mxu0 0
  %271 = vmatprep.subr.bf16.mxu0 0
  %272 = vmatpush2.bf16.msra.mxu0 0
  %273 = vmatprep.subr.bf16.mxu0 0
  %274 = vmatpush2.bf16.msra.mxu0 0
  %275 = vmatprep.subr.bf16.mxu0 0
  %276 = vmatpush2.bf16.msra.mxu0 0
  %277 = vmatprep.subr.bf16.mxu0 0
  %278 = vmatpush2.bf16.msra.mxu0 0
  %279 = vmatprep.subr.bf16.mxu0 0
  %280 = vmatpush2.bf16.msra.mxu0 0
  %281 = vmatprep.subr.bf16.mxu0 0
  %282 = vmatpush2.bf16.msra.mxu0 0
  %283 = vmatprep.subr.bf16.mxu0 0
  %284 = vmatpush2.bf16.msra.mxu0 0
  %285 = vmatprep.mubr.bf16.mxu0 0
  %286 = vmatmul.mubr.bf16.gmra.mxu0 %v181
  %v287 = vpop.f32.mrf.mxu0
  %v288 = vadd.f32 %v203, %v287
  %v289 = vpop.f32.mrf.mxu0
  %v290 = vpop.f32.mrf.mxu0
  %v291 = vpop.f32.mrf.mxu0
  %292 = vdwg.mxu0
  %293 = vmax.xlane.f32.xlu0 %v288
  %v294 = vpop.xlane.xlu0 %293
  %v295 = vsub.f32 %v288, %v294
  %v296 = vmul.f32 %v295, 1.442695
  %v297 = vpow.pop %v296
  %298 = vadd.xlane.f32.xlu0 %v297
  %v299 = vpop.xlane.xlu0 %298
  %v300 = vrcp.pop %v299
  %v301 = vmul.f32 %v297, %v300
  %302 = vst [vmem:[%s7] sm:$0xff] %v301
  // Predicated region
  $region30: #{our_module_forward.1} parent=0 // pred_check
    _
  $region31: #{our_module_forward.1} parent=0 // pred_check_branch
    %304 = sbr.rel (0) target = $region33
  $region32: #{our_module_forward.1} parent=0 // pred_region
    _
  $region33: #{our_module_forward.1} parent=0 // pred_fallthru
    _
  // Predicated region
  $region34: #{our_module_forward.1} parent=0 // pred_check
    _
  $region35: #{our_module_forward.1} parent=0 // pred_check_branch
    %306 = sbr.rel (0) target = $region37
  $region36: #{our_module_forward.1} parent=0 // pred_region
    _
  $region37: #{our_module_forward.1} parent=0 // pred_fallthru
    _

</llo_original>
